<compile_context>
chip_gen: v6e
topology: v6e:2x2x1
jax: 0.10.0
libtpu: 0.0.40
codegen_flags: <defaults>
</compile_context>

<pallas_src>
import math

import jax
import jax.numpy as jnp
from jax import lax
from jax.experimental import pallas as pl
from jax.experimental.pallas import tpu as pltpu

_INV_SQRT2 = 1.0 / math.sqrt(2.0)


def _gelu_exact(h):
    # Exact erf GELU (matches torch.nn.GELU() default semantics).
    return 0.5 * h * (1.0 + lax.erf(h * _INV_SQRT2))


# --------------------------------------------------------------------------- #
# Kernels
# --------------------------------------------------------------------------- #
def _mlp_kernel_resident(x_ref, w1_ref, b1_ref, w2_ref, b2_ref, o_ref):
    """Full hidden dim resident in VMEM: fused fc1 -> GELU -> fc2 per row tile."""
    x = x_ref[...].astype(jnp.bfloat16)            # in-kernel cast; x is f32 in HBM
    h = jnp.dot(x, w1_ref[...], preferred_element_type=jnp.float32) + b1_ref[...]
    h = _gelu_exact(h)
    o = jnp.dot(h.astype(jnp.bfloat16), w2_ref[...],
                preferred_element_type=jnp.float32)
    o_ref[...] = (o + b2_ref[...]).astype(o_ref.dtype)


def _mlp_kernel_streamed(x_ref, w1_ref, b1_ref, w2_ref, b2_ref, o_ref, acc_ref):
    """Hidden dim tiled (reduction axis k); weights streamed in (C,th)/(th,Cout) slabs."""
    k = pl.program_id(1)

    x = x_ref[...].astype(jnp.bfloat16)
    h = jnp.dot(x, w1_ref[...], preferred_element_type=jnp.float32) + b1_ref[...]
    h = _gelu_exact(h)
    part = jnp.dot(h.astype(jnp.bfloat16), w2_ref[...],
                   preferred_element_type=jnp.float32)

    @pl.when(k == 0)
    def _():
        acc_ref[...] = part            # init with first partial (no zeroing pass)

    @pl.when(k > 0)
    def _():
        acc_ref[...] += part

    @pl.when(k == pl.num_programs(1) - 1)
    def _():
        o_ref[...] = (acc_ref[...] + b2_ref[...]).astype(o_ref.dtype)


# --------------------------------------------------------------------------- #
# Tiling / budget heuristics
# --------------------------------------------------------------------------- #
def _cdiv(a, b):
    return (a + b - 1) // b


def _round_up(a, b):
    return _cdiv(a, b) * b


def _vmem_budget_bytes():
    """Generation-aware scoped-VMEM budget (leave headroom for internal scratch)."""
    try:
        cap = int(pltpu.get_tpu_info().vmem_capacity_bytes)
    except Exception:
        cap = 64 * 2**20            # conservative fallback (v7x per-core VMEM)
    return max(int(cap * 0.8), cap - 16 * 2**20)


def _working_set_bytes(tm, th, C, Cout, out_itemsize, streamed):
    """Approximate VMEM footprint for one grid step (double-buffered blocks)."""
    bf2, f4 = 2, 4
    tot = 2 * tm * C * f4                 # x block (f32 in VMEM, double-buffered)
    tot += 2 * tm * Cout * out_itemsize   # output block
    tot += 2 * C * th * bf2               # w1 block/slab (bf16, 2 buffers)
    tot += 2 * th * Cout * bf2            # w2 block/slab
    tot += 2 * th * f4 + 2 * Cout * f4    # biases
    tot += 2 * tm * th * f4               # fc1/GELU intermediate (f32) + slack
    if streamed:
        tot += tm * Cout * f4             # f32 accumulator scratch
    return tot


def _choose_tiling(M, C, H, Cout, out_itemsize, budget):
    """Return (tm, th, streamed)."""

    def fits(tm, th, streamed):
        return _working_set_bytes(tm, th, C, Cout, out_itemsize, streamed) <= budget

    def pick_tm(target):
        tm = min(target, _round_up(M, 256))            # multiple of 256 for the MXU
        # Prefer >= 2 row tiles so the "parallel" axis can shard across cores.
        if tm > 256 and _cdiv(M, tm) < 2:
            tm = max(256, _round_up(_cdiv(M, 2), 256))
        return tm

    # --- Resident-weights path: weights DMA'd once, kept in VMEM for all rows.
    for target in (512, 256):
        tm = pick_tm(target)
        if fits(tm, H, streamed=False):
            return tm, H, False

    # --- Streamed path: weights re-read per row tile -> raise tm (intensity on
    # weight bytes == tm FLOPs/byte); th = multiple-of-128 divisor of H (>=512
    # preferred for DMA burst efficiency, capped to bound the h intermediate).
    divisors = sorted((t for t in range(128, H + 1, 128) if H % t == 0),
                      reverse=True)
    if not divisors:
        # Hidden dim not lane-tileable; keep full H (single reduction step).
        return pick_tm(256), H, False
    for target in (1024, 768, 512, 256):
        tm = pick_tm(target)
        for th in divisors:
            if th > 2048:
                continue
            if fits(tm, th, streamed=True):
                return tm, th, True
    return 256, divisors[-1], True        # last resort: smallest tiles


# --------------------------------------------------------------------------- #
# Wrapper
# --------------------------------------------------------------------------- #
def mlp_pallas(x, w1, b1, w2, b2):
    """x: (B, N, C); w1: (C, H); b1: (H,); w2: (H, Cout); b2: (Cout,)."""
    B, N, C = x.shape
    H = w1.shape[1]
    Cout = w2.shape[1]
    M = B * N
    out_dtype = x.dtype
    out_itemsize = jnp.dtype(out_dtype).itemsize

    budget = _vmem_budget_bytes()
    tm, th, streamed = _choose_tiling(M, C, H, Cout, out_itemsize, budget)

    # Pad rows only if needed (zero cost in the common divisible case).
    M_pad = _round_up(M, tm)
    x2d = x.reshape(M, C)
    if M_pad != M:
        x2d = jnp.pad(x2d, ((0, M_pad - M), (0, 0)))

    # One-time bf16 weight copies (hoist to parameter-load time when the MLP
    # is applied repeatedly); biases stay f32 for the f32 accumulate/add.
    w1_bf = w1.astype(jnp.bfloat16)
    w2_bf = w2.astype(jnp.bfloat16)
    b1_2d = b1.reshape(1, H).astype(jnp.float32)
    b2_2d = b2.reshape(1, Cout).astype(jnp.float32)

    n_rows = M_pad // tm
    weight_passes = 1 if not streamed else n_rows
    cost = pl.CostEstimate(
        flops=2 * M_pad * H * (C + Cout),
        transcendentals=M_pad * H,
        bytes_accessed=(M_pad * C * 4 + M_pad * Cout * out_itemsize
                        + weight_passes * (C * H + H * Cout) * 2
                        + (H + Cout) * 4),
    )

    if not streamed:
        grid = (n_rows,)
        in_specs = [
            pl.BlockSpec((tm, C), lambda i: (i, 0)),       # x row tile
            pl.BlockSpec((C, H), lambda i: (0, 0)),        # w1 (resident)
            pl.BlockSpec((1, H), lambda i: (0, 0)),        # b1
            pl.BlockSpec((H, Cout), lambda i: (0, 0)),     # w2 (resident)
            pl.BlockSpec((1, Cout), lambda i: (0, 0)),     # b2
        ]
        out_spec = pl.BlockSpec((tm, Cout), lambda i: (i, 0))
        kernel = _mlp_kernel_resident
        scratch = []
        dims = ("parallel",)
    else:
        grid = (n_rows, H // th)
        in_specs = [
            pl.BlockSpec((tm, C), lambda i, k: (i, 0)),    # x row tile (kept across k)
            pl.BlockSpec((C, th), lambda i, k: (0, k)),    # w1 slab
            pl.BlockSpec((1, th), lambda i, k: (0, k)),    # b1 slab
            pl.BlockSpec((th, Cout), lambda i, k: (k, 0)), # w2 slab
            pl.BlockSpec((1, Cout), lambda i, k: (0, 0)),  # b2
        ]
        out_spec = pl.BlockSpec((tm, Cout), lambda i, k: (i, 0))
        kernel = _mlp_kernel_streamed
        scratch = [pltpu.VMEM((tm, Cout), jnp.float32)]
        dims = ("parallel", "arbitrary")

    out2d = pl.pallas_call(
        kernel,
        out_shape=jax.ShapeDtypeStruct((M_pad, Cout), out_dtype),
        grid_spec=pltpu.PrefetchScalarGridSpec(
            num_scalar_prefetch=0,
            grid=grid,
            in_specs=in_specs,
            out_specs=out_spec,
            scratch_shapes=scratch,
        ),
        compiler_params=pltpu.CompilerParams(
            dimension_semantics=dims,
            vmem_limit_bytes=int(budget),
        ),
        cost_estimate=cost,
    )(x2d, w1_bf, b1_2d, w2_bf, b2_2d)

    if M_pad != M:
        out2d = out2d[:M]
    return out2d.reshape(B, N, Cout)


def mlp_reference(x, w1, b1, w2, b2):
    h = jnp.dot(x, w1) + b1
    h = 0.5 * h * (1.0 + lax.erf(h / jnp.sqrt(2.0)))
    return jnp.dot(h, w2) + b2


if __name__ == "__main__":
    # Small shapes consistent with the ViT MLP: (B, N, C) tokens.
    B, N = 2, 8
    in_features = 32
    hidden_features = 64
    out_features = in_features

    key = jax.random.PRNGKey(0)
    kx, kw1, kb1, kw2, kb2 = jax.random.split(key, 5)

    x = jax.random.normal(kx, (B, N, in_features), dtype=jnp.float32)

    # Deterministic parameter init (Kaiming-uniform-like bounds, as nn.Linear).
    bound1 = 1.0 / math.sqrt(in_features)
    w1 = jax.random.uniform(kw1, (in_features, hidden_features),
                            minval=-bound1, maxval=bound1, dtype=jnp.float32)
    b1 = jax.random.uniform(kb1, (hidden_features,),
                            minval=-bound1, maxval=bound1, dtype=jnp.float32)
    bound2 = 1.0 / math.sqrt(hidden_features)
    w2 = jax.random.uniform(kw2, (hidden_features, out_features),
                            minval=-bound2, maxval=bound2, dtype=jnp.float32)
    b2 = jax.random.uniform(kb2, (out_features,),
                            minval=-bound2, maxval=bound2, dtype=jnp.float32)

    out = mlp_pallas(x, w1, b1, w2, b2)
    out = jax.block_until_ready(out)

    ref = mlp_reference(x, w1, b1, w2, b2)
    assert out.shape == (B, N, out_features)
    # bf16 MXU operands with f32 accumulation -> relaxed tolerance vs f32 ref.
    assert jnp.allclose(out, ref, atol=2e-2, rtol=2e-2), "mismatch vs reference"

    print("KERNEL_OK")
</pallas_src>

<mosaic_0001>
module attributes {stable_mosaic.version = 11 : i64} {
  func.func @_mlp_kernel_resident(%arg0: i32, %arg1: memref<256x32xf32, #tpu.memory_space<vmem>>, %arg2: memref<32x64xbf16, #tpu.memory_space<vmem>>, %arg3: memref<1x64xf32, #tpu.memory_space<vmem>>, %arg4: memref<64x32xbf16, #tpu.memory_space<vmem>>, %arg5: memref<1x32xf32, #tpu.memory_space<vmem>>, %arg6: memref<256x32xf32, #tpu.memory_space<vmem>>) attributes {dimension_semantics = [#tpu.dimension_semantics<parallel>], iteration_bounds = array<i64: 1>, scalar_prefetch = 0 : i64, scratch_operands = 0 : i64, tpu.core_type = #tpu.core_type<tc>, window_params = [{transform_indices = @transform_0, window_bounds = array<i64: 256, 32>}, {pipeline_mode = #tpu.pipeline_mode<synchronous>, transform_indices = @transform_1, window_bounds = array<i64: 32, 64>}, {pipeline_mode = #tpu.pipeline_mode<synchronous>, transform_indices = @transform_2, window_bounds = array<i64: 1, 64>}, {pipeline_mode = #tpu.pipeline_mode<synchronous>, transform_indices = @transform_3, window_bounds = array<i64: 64, 32>}, {pipeline_mode = #tpu.pipeline_mode<synchronous>, transform_indices = @transform_4, window_bounds = array<i64: 1, 32>}, {transform_indices = @transform_5, window_bounds = array<i64: 256, 32>}]} {
    %c0 = arith.constant 0 : index
    %c0_0 = arith.constant 0 : index
    %0 = vector.load %arg1[%c0, %c0_0] : memref<256x32xf32, #tpu.memory_space<vmem>>, vector<256x32xf32>
    %1 = arith.truncf %0 : vector<256x32xf32> to vector<256x32xbf16>
    %c0_1 = arith.constant 0 : index
    %c0_2 = arith.constant 0 : index
    %2 = vector.load %arg2[%c0_1, %c0_2] : memref<32x64xbf16, #tpu.memory_space<vmem>>, vector<32x64xbf16>
    %cst = arith.constant dense<0.000000e+00> : vector<256x64xf32>
    %3 = tpu.matmul %1, %2, %cst {dimension_numbers = #tpu.dot_dimension_numbers<[1], [0], [0], [1], [0, 0, 1, 1], [], []>} : vector<256x32xbf16>, vector<32x64xbf16>, vector<256x64xf32> -> vector<256x64xf32>
    %c0_3 = arith.constant 0 : index
    %c0_4 = arith.constant 0 : index
    %4 = vector.load %arg3[%c0_3, %c0_4] : memref<1x64xf32, #tpu.memory_space<vmem>>, vector<1x64xf32>
    %5 = vector.broadcast %4 : vector<1x64xf32> to vector<256x64xf32>
    %6 = arith.addf %3, %5 : vector<256x64xf32>
    %cst_5 = arith.constant 5.000000e-01 : f32
    %7 = vector.broadcast %cst_5 : f32 to vector<256x64xf32>
    %8 = arith.mulf %7, %6 : vector<256x64xf32>
    %cst_6 = arith.constant 0.707106769 : f32
    %9 = vector.broadcast %cst_6 : f32 to vector<256x64xf32>
    %10 = arith.mulf %6, %9 : vector<256x64xf32>
    %11 = math.erf %10 : vector<256x64xf32>
    %cst_7 = arith.constant 1.000000e+00 : f32
    %12 = vector.broadcast %cst_7 : f32 to vector<256x64xf32>
    %13 = arith.addf %12, %11 : vector<256x64xf32>
    %14 = arith.mulf %8, %13 : vector<256x64xf32>
    %15 = arith.truncf %14 : vector<256x64xf32> to vector<256x64xbf16>
    %c0_8 = arith.constant 0 : index
    %c0_9 = arith.constant 0 : index
    %16 = vector.load %arg4[%c0_8, %c0_9] : memref<64x32xbf16, #tpu.memory_space<vmem>>, vector<64x32xbf16>
    %cst_10 = arith.constant dense<0.000000e+00> : vector<256x32xf32>
    %17 = tpu.matmul %15, %16, %cst_10 {dimension_numbers = #tpu.dot_dimension_numbers<[1], [0], [0], [1], [0, 0, 1, 1], [], []>} : vector<256x64xbf16>, vector<64x32xbf16>, vector<256x32xf32> -> vector<256x32xf32>
    %c0_11 = arith.constant 0 : index
    %c0_12 = arith.constant 0 : index
    %18 = vector.load %arg5[%c0_11, %c0_12] : memref<1x32xf32, #tpu.memory_space<vmem>>, vector<1x32xf32>
    %19 = vector.broadcast %18 : vector<1x32xf32> to vector<256x32xf32>
    %20 = arith.addf %17, %19 : vector<256x32xf32>
    %c0_13 = arith.constant 0 : index
    %c0_14 = arith.constant 0 : index
    %21 = vector.load %arg6[%c0_13, %c0_14] : memref<256x32xf32, #tpu.memory_space<vmem>>, vector<256x32xf32>
    tpu.vector_store %arg6[%c0_13, %c0_14], %20 {strides = array<i32>} : memref<256x32xf32, #tpu.memory_space<vmem>>, vector<256x32xf32>,
    return
  }
  func.func @transform_0(%arg0: i32) -> (i32, i32) {
    %c0_i32 = arith.constant 0 : i32
    %c0_i32_0 = arith.constant 0 : i32
    return %arg0, %c0_i32 : i32, i32
  }
  func.func @transform_1(%arg0: i32) -> (i32, i32) {
    %c0_i32 = arith.constant 0 : i32
    %c0_i32_0 = arith.constant 0 : i32
    %c0_i32_1 = arith.constant 0 : i32
    return %c0_i32, %c0_i32_0 : i32, i32
  }
  func.func @transform_2(%arg0: i32) -> (i32, i32) {
    %c0_i32 = arith.constant 0 : i32
    %c0_i32_0 = arith.constant 0 : i32
    %c0_i32_1 = arith.constant 0 : i32
    return %c0_i32, %c0_i32_0 : i32, i32
  }
  func.func @transform_3(%arg0: i32) -> (i32, i32) {
    %c0_i32 = arith.constant 0 : i32
    %c0_i32_0 = arith.constant 0 : i32
    %c0_i32_1 = arith.constant 0 : i32
    return %c0_i32, %c0_i32_0 : i32, i32
  }
  func.func @transform_4(%arg0: i32) -> (i32, i32) {
    %c0_i32 = arith.constant 0 : i32
    %c0_i32_0 = arith.constant 0 : i32
    %c0_i32_1 = arith.constant 0 : i32
    return %c0_i32, %c0_i32_0 : i32, i32
  }
  func.func @transform_5(%arg0: i32) -> (i32, i32) {
    %c0_i32 = arith.constant 0 : i32
    %c0_i32_0 = arith.constant 0 : i32
    return %arg0, %c0_i32 : i32, i32
  }
}

</mosaic_0001>

<llo_original>
// kernel: tpu_custom_call.1
$region0: #{tpu_custom_call.1}
  #allocation0 [shape = 'u32[]', space=smem, size = 0x4, offset = 0x4, fixed_abs, tag = 'smem constant byte address 0x4 - core index']
  #allocation1 [shape = 'u32[144,128]{1,0:T(1,128)}', space=vmem, size = 0x12000, scoped, tag = 'internal scratch']
  %s0 = inlined_call_operand.vmem [shape: f32[256,32], index: 0, kind: input, shape index: {}]
  %s1 = inlined_call_operand.vmem [shape: bf16[32,64], index: 1, kind: input, shape index: {}]
  %s2 = inlined_call_operand.vmem [shape: f32[1,64], index: 2, kind: input, shape index: {}]
  %s3 = inlined_call_operand.vmem [shape: bf16[64,32], index: 3, kind: input, shape index: {}]
  %s4 = inlined_call_operand.vmem [shape: f32[1,32], index: 4, kind: input, shape index: {}]
  %s5 = inlined_call_operand.vmem [shape: f32[256,32], index: 5, kind: output, shape index: {}]
  %s6 = sld [smem:[#allocation0]]
  $region30: #{tpu_custom_call.1} parent=0
    _
  %s8 = ssub.s32 1, %s6
  %s9 = scalar_select 0, %s8, %s6
  // Predicated region
  $region2: #{tpu_custom_call.1} parent=0 // pred_check
    _
  $region3: #{tpu_custom_call.1} parent=0 // pred_check_branch
    %11 = sbr.rel (0) target = $region5
  $region4: #{tpu_custom_call.1} parent=0 // pred_region
    _
  $region5: #{tpu_custom_call.1} parent=0 // pred_fallthru
    _
  // Predicated region
  $region6: #{tpu_custom_call.1} parent=0 // pred_check
    _
  $region7: #{tpu_custom_call.1} parent=0 // pred_check_branch
    %13 = sbr.rel (0) target = $region9
  $region8: #{tpu_custom_call.1} parent=0 // pred_region
    _
  $region9: #{tpu_custom_call.1} parent=0 // pred_fallthru
    _
  // Predicated region
  $region10: #{tpu_custom_call.1} parent=0 // pred_check
    _
  $region11: #{tpu_custom_call.1} parent=0 // pred_check_branch
    %15 = sbr.rel (0) target = $region13
  $region12: #{tpu_custom_call.1} parent=0 // pred_region
    _
  $region13: #{tpu_custom_call.1} parent=0 // pred_fallthru
    _
  // Predicated region
  $region14: #{tpu_custom_call.1} parent=0 // pred_check
    _
  $region15: #{tpu_custom_call.1} parent=0 // pred_check_branch
    %17 = sbr.rel (0) target = $region17
  $region16: #{tpu_custom_call.1} parent=0 // pred_region
    _
  $region17: #{tpu_custom_call.1} parent=0 // pred_fallthru
    _
  // Predicated region
  $region18: #{tpu_custom_call.1} parent=0 // pred_check
    _
  $region19: #{tpu_custom_call.1} parent=0 // pred_check_branch
    %19 = sbr.rel (0) target = $region21
  $region20: #{tpu_custom_call.1} parent=0 // pred_region
    _
  $region21: #{tpu_custom_call.1} parent=0 // pred_fallthru
    _
  %v21 = vld [vmem:[%s0] sm:$0xff]
  %v22 = vld [vmem:[%s0 + $0x8] sm:$0xff]
  %v23 = vld [vmem:[%s0 + $0x10] sm:$0xff]
  %v24 = vld [vmem:[%s0 + $0x18] sm:$0xff]
  %v25 = vld [vmem:[%s0 + $0x20] sm:$0xff]
  %v26 = vld [vmem:[%s0 + $0x28] sm:$0xff]
  %v27 = vld [vmem:[%s0 + $0x30] sm:$0xff]
  %v28 = vld [vmem:[%s0 + $0x38] sm:$0xff]
  %v29 = vld [vmem:[%s0 + $0x40] sm:$0xff]
  %v30 = vld [vmem:[%s0 + $0x48] sm:$0xff]
  %v31 = vld [vmem:[%s0 + $0x50] sm:$0xff]
  %v32 = vld [vmem:[%s0 + $0x58] sm:$0xff]
  %v33 = vld [vmem:[%s0 + $0x60] sm:$0xff]
  %v34 = vld [vmem:[%s0 + $0x68] sm:$0xff]
  %v35 = vld [vmem:[%s0 + $0x70] sm:$0xff]
  %v36 = vld [vmem:[%s0 + $0x78] sm:$0xff]
  %v37 = vld [vmem:[%s0 + $0x80] sm:$0xff]
  %v38 = vld [vmem:[%s0 + $0x88] sm:$0xff]
  %v39 = vld [vmem:[%s0 + $0x90] sm:$0xff]
  %v40 = vld [vmem:[%s0 + $0x98] sm:$0xff]
  %v41 = vld [vmem:[%s0 + $0xa0] sm:$0xff]
  %v42 = vld [vmem:[%s0 + $0xa8] sm:$0xff]
  %v43 = vld [vmem:[%s0 + $0xb0] sm:$0xff]
  %v44 = vld [vmem:[%s0 + $0xb8] sm:$0xff]
  %v45 = vld [vmem:[%s0 + $0xc0] sm:$0xff]
  %v46 = vld [vmem:[%s0 + $0xc8] sm:$0xff]
  %v47 = vld [vmem:[%s0 + $0xd0] sm:$0xff]
  %v48 = vld [vmem:[%s0 + $0xd8] sm:$0xff]
  %v49 = vld [vmem:[%s0 + $0xe0] sm:$0xff]
  %v50 = vld [vmem:[%s0 + $0xe8] sm:$0xff]
  %v51 = vld [vmem:[%s0 + $0xf0] sm:$0xff]
  %v52 = vld [vmem:[%s0 + $0xf8] sm:$0xff]
  %v53 = vpack.c.bf16 %v22, %v21
  %v54 = vpack.c.bf16 %v24, %v23
  %v55 = vpack.c.bf16 %v26, %v25
  %v56 = vpack.c.bf16 %v28, %v27
  %v57 = vpack.c.bf16 %v30, %v29
  %v58 = vpack.c.bf16 %v32, %v31
  %v59 = vpack.c.bf16 %v34, %v33
  %v60 = vpack.c.bf16 %v36, %v35
  %v61 = vpack.c.bf16 %v38, %v37
  %v62 = vpack.c.bf16 %v40, %v39
  %v63 = vpack.c.bf16 %v42, %v41
  %v64 = vpack.c.bf16 %v44, %v43
  %v65 = vpack.c.bf16 %v46, %v45
  %v66 = vpack.c.bf16 %v48, %v47
  %v67 = vpack.c.bf16 %v50, %v49
  %v68 = vpack.c.bf16 %v52, %v51
  %v69 = vld [vmem:[%s1] sm:$0xf]
  %v70 = vld [vmem:[%s1 + $0x4] sm:$0xf]
  %v71 = vld [vmem:[%s1 + $0x8] sm:$0xf]
  %v72 = vld [vmem:[%s1 + $0xc] sm:$0xf]
  %v73 = vld [vmem:[%s2] sm:$0x1]
  %v75 = vlaneseq
  %v76 = vshrl.u32 %v75, 7
  %v77 = vsub.s32 0, %v76
  %v78 = vrot.slane %v73, %v77
  %v84 = vunpack.c.l.b16 %v69
  %v85 = vunpack.c.l.b16 %v70
  %v86 = vunpack.c.l.b16 %v71
  %v87 = vunpack.c.l.b16 %v72
  %v88 = vpack.c.b16 %v85, %v84
  %v89 = vpack.c.b16 %v87, %v86
  %vm92 = vcmask 261120
  %v94 = vsel %vm92, %v53, 0
  %v97 = vsel %vm92, %v54, 0
  %v100 = vsel %vm92, %v55, 0
  %v103 = vsel %vm92, %v56, 0
  %v106 = vsel %vm92, %v57, 0
  %v109 = vsel %vm92, %v58, 0
  %v112 = vsel %vm92, %v59, 0
  %v115 = vsel %vm92, %v60, 0
  %v118 = vsel %vm92, %v61, 0
  %v121 = vsel %vm92, %v62, 0
  %v124 = vsel %vm92, %v63, 0
  %v127 = vsel %vm92, %v64, 0
  %v130 = vsel %vm92, %v65, 0
  %v133 = vsel %vm92, %v66, 0
  %v136 = vsel %vm92, %v67, 0
  %v139 = vsel %vm92, %v68, 0
  %141 = vmatprep.subr.bf16.mxu0 0
  %142 = vmatpush1.bf16.msra.mxu0 0
  %143 = vmatprep.subr.bf16.mxu0 0
  %144 = vmatpush1.bf16.msra.mxu0 0
  %145 = vmatprep.subr.bf16.mxu0 0
  %146 = vmatpush1.bf16.msra.mxu0 0
  %147 = vmatprep.subr.bf16.mxu0 0
  %148 = vmatpush1.bf16.msra.mxu0 0
  %149 = vmatprep.subr.bf16.mxu0 0
  %150 = vmatpush1.bf16.msra.mxu0 0
  %151 = vmatprep.subr.bf16.mxu0 0
  %152 = vmatpush1.bf16.msra.mxu0 0
  %153 = vmatprep.subr.bf16.mxu0 0
  %154 = vmatpush1.bf16.msra.mxu0 %v89
  %155 = vmatprep.subr.bf16.mxu0 0
  %156 = vmatpush1.bf16.msra.mxu0 %v88
  %157 = vmatprep.subr.bf16.mxu0 0
  %158 = vmatpush2.bf16.msra.mxu0 0
  %159 = vmatprep.subr.bf16.mxu0 0
  %160 = vmatpush2.bf16.msra.mxu0 0
  %161 = vmatprep.subr.bf16.mxu0 0
  %162 = vmatpush2.bf16.msra.mxu0 0
  %163 = vmatprep.subr.bf16.mxu0 0
  %164 = vmatpush2.bf16.msra.mxu0 0
  %165 = vmatprep.subr.bf16.mxu0 0
  %166 = vmatpush2.bf16.msra.mxu0 0
  %167 = vmatprep.subr.bf16.mxu0 0
  %168 = vmatpush2.bf16.msra.mxu0 0
  %169 = vmatprep.subr.bf16.mxu0 0
  %170 = vmatpush2.bf16.msra.mxu0 0
  %171 = vmatprep.subr.bf16.mxu0 0
  %172 = vmatpush2.bf16.msra.mxu0 0
  %173 = vmatprep.mubr.bf16.mxu0 0
  %174 = vmatmul.mubr.bf16.gmra.mxu0 %v94
  %v175 = vpop.f32.mrf.mxu0
  %v176 = vadd.f32 %v78, %v175
  %v177 = vpop.f32.mrf.mxu0
  %v178 = vpop.f32.mrf.mxu0
  %v179 = vadd.f32 %v78, %v178
  %v180 = vpop.f32.mrf.mxu0
  %181 = vmatprep.mubr.bf16.mxu0 0
  %182 = vmatmul.mubr.bf16.gmra.mxu0 %v97
  %v183 = vpop.f32.mrf.mxu0
  %v184 = vadd.f32 %v78, %v183
  %v185 = vpop.f32.mrf.mxu0
  %v186 = vpop.f32.mrf.mxu0
  %v187 = vadd.f32 %v78, %v186
  %v188 = vpop.f32.mrf.mxu0
  %189 = vmatprep.mubr.bf16.mxu0 0
  %190 = vmatmul.mubr.bf16.gmra.mxu0 %v100
  %v191 = vpop.f32.mrf.mxu0
  %v192 = vadd.f32 %v78, %v191
  %v193 = vpop.f32.mrf.mxu0
  %v194 = vpop.f32.mrf.mxu0
  %v195 = vadd.f32 %v78, %v194
  %v196 = vpop.f32.mrf.mxu0
  %197 = vmatprep.mubr.bf16.mxu0 0
  %198 = vmatmul.mubr.bf16.gmra.mxu0 %v103
  %v199 = vpop.f32.mrf.mxu0
  %v200 = vadd.f32 %v78, %v199
  %v201 = vpop.f32.mrf.mxu0
  %v202 = vpop.f32.mrf.mxu0
  %v203 = vadd.f32 %v78, %v202
  %v204 = vpop.f32.mrf.mxu0
  %205 = vmatprep.mubr.bf16.mxu0 0
  %206 = vmatmul.mubr.bf16.gmra.mxu0 %v106
  %v207 = vpop.f32.mrf.mxu0
  %v208 = vadd.f32 %v78, %v207
  %v209 = vpop.f32.mrf.mxu0
  %v210 = vpop.f32.mrf.mxu0
  %v211 = vadd.f32 %v78, %v210
  %v212 = vpop.f32.mrf.mxu0
  %213 = vmatprep.mubr.bf16.mxu0 0
  %214 = vmatmul.mubr.bf16.gmra.mxu0 %v109
  %v215 = vpop.f32.mrf.mxu0
  %v216 = vadd.f32 %v78, %v215
  %v217 = vpop.f32.mrf.mxu0
  %v218 = vpop.f32.mrf.mxu0
  %v219 = vadd.f32 %v78, %v218
  %v220 = vpop.f32.mrf.mxu0
  %221 = vmatprep.mubr.bf16.mxu0 0
  %222 = vmatmul.mubr.bf16.gmra.mxu0 %v112
  %v223 = vpop.f32.mrf.mxu0
  %v224 = vadd.f32 %v78, %v223
  %v225 = vpop.f32.mrf.mxu0
  %v226 = vpop.f32.mrf.mxu0
  %v227 = vadd.f32 %v78, %v226
  %v228 = vpop.f32.mrf.mxu0
  %229 = vmatprep.mubr.bf16.mxu0 0
  %230 = vmatmul.mubr.bf16.gmra.mxu0 %v115
  %v231 = vpop.f32.mrf.mxu0
  %v232 = vadd.f32 %v78, %v231
  %v233 = vpop.f32.mrf.mxu0
  %v234 = vpop.f32.mrf.mxu0
  %v235 = vadd.f32 %v78, %v234
  %v236 = vpop.f32.mrf.mxu0
  %237 = vmatprep.mubr.bf16.mxu0 0
  %238 = vmatmul.mubr.bf16.gmra.mxu0 %v118
  %v239 = vpop.f32.mrf.mxu0
  %v240 = vadd.f32 %v78, %v239
  %v241 = vpop.f32.mrf.mxu0
  %v242 = vpop.f32.mrf.mxu0
  %v243 = vadd.f32 %v78, %v242
  %v244 = vpop.f32.mrf.mxu0
  %245 = vmatprep.mubr.bf16.mxu0 0
  %246 = vmatmul.mubr.bf16.gmra.mxu0 %v121
  %v247 = vpop.f32.mrf.mxu0
  %v248 = vadd.f32 %v78, %v247
  %v249 = vpop.f32.mrf.mxu0
  %v250 = vpop.f32.mrf.mxu0
  %v251 = vadd.f32 %v78, %v250
  %v252 = vpop.f32.mrf.mxu0
  %253 = vmatprep.mubr.bf16.mxu0 0
  %254 = vmatmul.mubr.bf16.gmra.mxu0 %v124
  %v255 = vpop.f32.mrf.mxu0
  %v256 = vadd.f32 %v78, %v255
  %v257 = vpop.f32.mrf.mxu0
  %v258 = vpop.f32.mrf.mxu0
  %v259 = vadd.f32 %v78, %v258
  %v260 = vpop.f32.mrf.mxu0
  %261 = vmatprep.mubr.bf16.mxu0 0
  %262 = vmatmul.mubr.bf16.gmra.mxu0 %v127
  %v263 = vpop.f32.mrf.mxu0
  %v264 = vadd.f32 %v78, %v263
  %v265 = vpop.f32.mrf.mxu0
  %v266 = vpop.f32.mrf.mxu0
  %v267 = vadd.f32 %v78, %v266
  %v268 = vpop.f32.mrf.mxu0
  %269 = vmatprep.mubr.bf16.mxu0 0
  %270 = vmatmul.mubr.bf16.gmra.mxu0 %v130
  %v271 = vpop.f32.mrf.mxu0
  %v272 = vadd.f32 %v78, %v271
  %v273 = vpop.f32.mrf.mxu0
  %v274 = vpop.f32.mrf.mxu0
  %v275 = vadd.f32 %v78, %v274
  %v276 = vpop.f32.mrf.mxu0
  %277 = vmatprep.mubr.bf16.mxu0 0
  %278 = vmatmul.mubr.bf16.gmra.mxu0 %v133
  %v279 = vpop.f32.mrf.mxu0
  %v280 = vadd.f32 %v78, %v279
  %v281 = vpop.f32.mrf.mxu0
  %v282 = vpop.f32.mrf.mxu0
  %v283 = vadd.f32 %v78, %v282
  %v284 = vpop.f32.mrf.mxu0
  %285 = vmatprep.mubr.bf16.mxu0 0
  %286 = vmatmul.mubr.bf16.gmra.mxu0 %v136
  %v287 = vpop.f32.mrf.mxu0
  %v288 = vadd.f32 %v78, %v287
  %v289 = vpop.f32.mrf.mxu0
  %v290 = vpop.f32.mrf.mxu0
  %v291 = vadd.f32 %v78, %v290
  %v292 = vpop.f32.mrf.mxu0
  %293 = vmatprep.mubr.bf16.mxu0 0
  %294 = vmatmul.mubr.bf16.gmra.mxu0 %v139
  %v295 = vpop.f32.mrf.mxu0
  %v296 = vadd.f32 %v78, %v295
  %v297 = vpop.f32.mrf.mxu0
  %v298 = vpop.f32.mrf.mxu0
  %v299 = vadd.f32 %v78, %v298
  %v300 = vpop.f32.mrf.mxu0
  %301 = vdwg.mxu0
  %v302 = vmul.f32 %v176, 0.5
  %v303 = vmul.f32 %v179, 0.5
  %v304 = vmul.f32 %v184, 0.5
  %v305 = vmul.f32 %v187, 0.5
  %v306 = vmul.f32 %v192, 0.5
  %v307 = vmul.f32 %v195, 0.5
  %v308 = vmul.f32 %v200, 0.5
  %v309 = vmul.f32 %v203, 0.5
  %v310 = vmul.f32 %v208, 0.5
  %v311 = vmul.f32 %v211, 0.5
  %v312 = vmul.f32 %v216, 0.5
  %v313 = vmul.f32 %v219, 0.5
  %v314 = vmul.f32 %v224, 0.5
  %v315 = vmul.f32 %v227, 0.5
  %v316 = vmul.f32 %v232, 0.5
  %v317 = vmul.f32 %v235, 0.5
  %v318 = vmul.f32 %v240, 0.5
  %v319 = vmul.f32 %v243, 0.5
  %v320 = vmul.f32 %v248, 0.5
  %v321 = vmul.f32 %v251, 0.5
  %v322 = vmul.f32 %v256, 0.5
  %v323 = vmul.f32 %v259, 0.5
  %v324 = vmul.f32 %v264, 0.5
  %v325 = vmul.f32 %v267, 0.5
  %v326 = vmul.f32 %v272, 0.5
  %v327 = vmul.f32 %v275, 0.5
  %v328 = vmul.f32 %v280, 0.5
  %v329 = vmul.f32 %v283, 0.5
  %v330 = vmul.f32 %v288, 0.5
  %v331 = vmul.f32 %v291, 0.5
  %v332 = vmul.f32 %v296, 0.5
  %v333 = vmul.f32 %v299, 0.5
  %v334 = vmul.f32 %v176, 0.70710677
  %v335 = vmul.f32 %v179, 0.70710677
  %v336 = vmul.f32 %v184, 0.70710677
  %v337 = vmul.f32 %v187, 0.70710677
  %v338 = vmul.f32 %v192, 0.70710677
  %v339 = vmul.f32 %v195, 0.70710677
  %v340 = vmul.f32 %v200, 0.70710677
  %v341 = vmul.f32 %v203, 0.70710677
  %v342 = vmul.f32 %v208, 0.70710677
  %v343 = vmul.f32 %v211, 0.70710677
  %v344 = vmul.f32 %v216, 0.70710677
  %v345 = vmul.f32 %v219, 0.70710677
  %v346 = vmul.f32 %v224, 0.70710677
  %v347 = vmul.f32 %v227, 0.70710677
  %v348 = vmul.f32 %v232, 0.70710677
  %v349 = vmul.f32 %v235, 0.70710677
  %v350 = vmul.f32 %v240, 0.70710677
  %v351 = vmul.f32 %v243, 0.70710677
  %v352 = vmul.f32 %v248, 0.70710677
  %v353 = vmul.f32 %v251, 0.70710677
  %v354 = vmul.f32 %v256, 0.70710677
  %v355 = vmul.f32 %v259, 0.70710677
  %v356 = vmul.f32 %v264, 0.70710677
  %v357 = vmul.f32 %v267, 0.70710677
  %v358 = vmul.f32 %v272, 0.70710677
  %v359 = vmul.f32 %v275, 0.70710677
  %v360 = vmul.f32 %v280, 0.70710677
  %v361 = vmul.f32 %v283, 0.70710677
  %v362 = vmul.f32 %v288, 0.70710677
  %v363 = vmul.f32 %v291, 0.70710677
  %v364 = vmul.f32 %v296, 0.70710677
  %v365 = vmul.f32 %v299, 0.70710677
  %v366 = verf.f32.pop %v334
  %v367 = verf.f32.pop %v335
  %v368 = verf.f32.pop %v336
  %v369 = verf.f32.pop %v337
  %v370 = verf.f32.pop %v338
  %v371 = verf.f32.pop %v339
  %v372 = verf.f32.pop %v340
  %v373 = verf.f32.pop %v341
  %v374 = verf.f32.pop %v342
  %v375 = verf.f32.pop %v343
  %v376 = verf.f32.pop %v344
  %v377 = verf.f32.pop %v345
  %v378 = verf.f32.pop %v346
  %v379 = verf.f32.pop %v347
  %v380 = verf.f32.pop %v348
  %v381 = verf.f32.pop %v349
  %v382 = verf.f32.pop %v350
  %v383 = verf.f32.pop %v351
  %v384 = verf.f32.pop %v352
  %v385 = verf.f32.pop %v353
  %v386 = verf.f32.pop %v354
  %v387 = verf.f32.pop %v355
  %v388 = verf.f32.pop %v356
  %v389 = verf.f32.pop %v357
  %v390 = verf.f32.pop %v358
  %v391 = verf.f32.pop %v359
  %v392 = verf.f32.pop %v360
  %v393 = verf.f32.pop %v361
  %v394 = verf.f32.pop %v362
  %v395 = verf.f32.pop %v363
  %v396 = verf.f32.pop %v364
  %v397 = verf.f32.pop %v365
  %v398 = vadd.f32 %v366, 1.0
  %v399 = vadd.f32 %v367, 1.0
  %v400 = vadd.f32 %v368, 1.0
  %v401 = vadd.f32 %v369, 1.0
  %v402 = vadd.f32 %v370, 1.0
  %v403 = vadd.f32 %v371, 1.0
  %v404 = vadd.f32 %v372, 1.0
  %v405 = vadd.f32 %v373, 1.0
  %v406 = vadd.f32 %v374, 1.0
  %v407 = vadd.f32 %v375, 1.0
  %v408 = vadd.f32 %v376, 1.0
  %v409 = vadd.f32 %v377, 1.0
  %v410 = vadd.f32 %v378, 1.0
  %v411 = vadd.f32 %v379, 1.0
  %v412 = vadd.f32 %v380, 1.0
  %v413 = vadd.f32 %v381, 1.0
  %v414 = vadd.f32 %v382, 1.0
  %v415 = vadd.f32 %v383, 1.0
  %v416 = vadd.f32 %v384, 1.0
  %v417 = vadd.f32 %v385, 1.0
  %v418 = vadd.f32 %v386, 1.0
  %v419 = vadd.f32 %v387, 1.0
  %v420 = vadd.f32 %v388, 1.0
  %v421 = vadd.f32 %v389, 1.0
  %v422 = vadd.f32 %v390, 1.0
  %v423 = vadd.f32 %v391, 1.0
  %v424 = vadd.f32 %v392, 1.0
  %v425 = vadd.f32 %v393, 1.0
  %v426 = vadd.f32 %v394, 1.0
  %v427 = vadd.f32 %v395, 1.0
  %v428 = vadd.f32 %v396, 1.0
  %v429 = vadd.f32 %v397, 1.0
  %v430 = vmul.f32 %v302, %v398
  %v431 = vmul.f32 %v303, %v399
  %v432 = vmul.f32 %v304, %v400
  %v433 = vmul.f32 %v305, %v401
  %v434 = vmul.f32 %v306, %v402
  %v435 = vmul.f32 %v307, %v403
  %v436 = vmul.f32 %v308, %v404
  %v437 = vmul.f32 %v309, %v405
  %v438 = vmul.f32 %v310, %v406
  %v439 = vmul.f32 %v311, %v407
  %v440 = vmul.f32 %v312, %v408
  %v441 = vmul.f32 %v313, %v409
  %v442 = vmul.f32 %v314, %v410
  %v443 = vmul.f32 %v315, %v411
  %v444 = vmul.f32 %v316, %v412
  %v445 = vmul.f32 %v317, %v413
  %v446 = vmul.f32 %v318, %v414
  %v447 = vmul.f32 %v319, %v415
  %v448 = vmul.f32 %v320, %v416
  %v449 = vmul.f32 %v321, %v417
  %v450 = vmul.f32 %v322, %v418
  %v451 = vmul.f32 %v323, %v419
  %v452 = vmul.f32 %v324, %v420
  %v453 = vmul.f32 %v325, %v421
  %v454 = vmul.f32 %v326, %v422
  %v455 = vmul.f32 %v327, %v423
  %v456 = vmul.f32 %v328, %v424
  %v457 = vmul.f32 %v329, %v425
  %v458 = vmul.f32 %v330, %v426
  %v459 = vmul.f32 %v331, %v427
  %v460 = vmul.f32 %v332, %v428
  %v461 = vmul.f32 %v333, %v429
  %v462 = vpack.c.bf16 %v431, %v430
  %v463 = vpack.c.bf16 %v433, %v432
  %v464 = vpack.c.bf16 %v435, %v434
  %v465 = vpack.c.bf16 %v437, %v436
  %v466 = vpack.c.bf16 %v439, %v438
  %v467 = vpack.c.bf16 %v441, %v440
  %v468 = vpack.c.bf16 %v443, %v442
  %v469 = vpack.c.bf16 %v445, %v444
  %v470 = vpack.c.bf16 %v447, %v446
  %v471 = vpack.c.bf16 %v449, %v448
  %v472 = vpack.c.bf16 %v451, %v450
  %v473 = vpack.c.bf16 %v453, %v452
  %v474 = vpack.c.bf16 %v455, %v454
  %v475 = vpack.c.bf16 %v457, %v456
  %v476 = vpack.c.bf16 %v459, %v458
  %v477 = vpack.c.bf16 %v461, %v460
  %v478 = vld [vmem:[%s3] sm:$0xf]
  %v479 = vld [vmem:[%s3 + $0x4] sm:$0xf]
  %v480 = vld [vmem:[%s3 + $0x8] sm:$0xf]
  %v481 = vld [vmem:[%s3 + $0xc] sm:$0xf]
  %v482 = vld [vmem:[%s3 + $0x10] sm:$0xf]
  %v483 = vld [vmem:[%s3 + $0x14] sm:$0xf]
  %v484 = vld [vmem:[%s3 + $0x18] sm:$0xf]
  %v485 = vld [vmem:[%s3 + $0x1c] sm:$0xf]
  %v486 = vld [vmem:[%s4] sm:$0x1]
  %v488 = vlaneseq
  %v489 = vshrl.u32 %v488, 7
  %v490 = vsub.s32 0, %v489
  %v491 = vrot.slane %v486, %v490
  %v501 = vunpack.c.l.b16 %v478
  %v502 = vunpack.c.l.b16 %v479
  %v503 = vunpack.c.l.b16 %v480
  %v504 = vunpack.c.l.b16 %v481
  %v505 = vunpack.c.l.b16 %v482
  %v506 = vunpack.c.l.b16 %v483
  %v507 = vunpack.c.l.b16 %v484
  %v508 = vunpack.c.l.b16 %v485
  %v509 = vpack.c.b16 %v502, %v501
  %v510 = vpack.c.b16 %v504, %v503
  %v511 = vpack.c.b16 %v506, %v505
  %v512 = vpack.c.b16 %v508, %v507
  %vm517 = vcmask 523264
  %v519 = vsel %vm517, %v462, 0
  %v522 = vsel %vm517, %v463, 0
  %v525 = vsel %vm517, %v464, 0
  %v528 = vsel %vm517, %v465, 0
  %v531 = vsel %vm517, %v466, 0
  %v534 = vsel %vm517, %v467, 0
  %v537 = vsel %vm517, %v468, 0
  %v540 = vsel %vm517, %v469, 0
  %v543 = vsel %vm517, %v470, 0
  %v546 = vsel %vm517, %v471, 0
  %v549 = vsel %vm517, %v472, 0
  %v552 = vsel %vm517, %v473, 0
  %v555 = vsel %vm517, %v474, 0
  %v558 = vsel %vm517, %v475, 0
  %v561 = vsel %vm517, %v476, 0
  %v564 = vsel %vm517, %v477, 0
  %566 = vmatprep.subr.bf16.mxu0 0
  %567 = vmatpush1.bf16.msra.mxu0 0
  %568 = vmatprep.subr.bf16.mxu0 0
  %569 = vmatpush1.bf16.msra.mxu0 0
  %570 = vmatprep.subr.bf16.mxu0 0
  %571 = vmatpush1.bf16.msra.mxu0 0
  %572 = vmatprep.subr.bf16.mxu0 0
  %573 = vmatpush1.bf16.msra.mxu0 0
  %574 = vmatprep.subr.bf16.mxu0 0
  %575 = vmatpush1.bf16.msra.mxu0 %v512
  %576 = vmatprep.subr.bf16.mxu0 0
  %577 = vmatpush1.bf16.msra.mxu0 %v511
  %578 = vmatprep.subr.bf16.mxu0 0
  %579 = vmatpush1.bf16.msra.mxu0 %v510
  %580 = vmatprep.subr.bf16.mxu0 0
  %581 = vmatpush1.bf16.msra.mxu0 %v509
  %582 = vmatprep.subr.bf16.mxu0 0
  %583 = vmatpush2.bf16.msra.mxu0 0
  %584 = vmatprep.subr.bf16.mxu0 0
  %585 = vmatpush2.bf16.msra.mxu0 0
  %586 = vmatprep.subr.bf16.mxu0 0
  %587 = vmatpush2.bf16.msra.mxu0 0
  %588 = vmatprep.subr.bf16.mxu0 0
  %589 = vmatpush2.bf16.msra.mxu0 0
  %590 = vmatprep.subr.bf16.mxu0 0
  %591 = vmatpush2.bf16.msra.mxu0 0
  %592 = vmatprep.subr.bf16.mxu0 0
  %593 = vmatpush2.bf16.msra.mxu0 0
  %594 = vmatprep.subr.bf16.mxu0 0
  %595 = vmatpush2.bf16.msra.mxu0 0
  %596 = vmatprep.subr.bf16.mxu0 0
  %597 = vmatpush2.bf16.msra.mxu0 0
  %598 = vmatprep.mubr.bf16.mxu0 0
  %599 = vmatmul.mubr.bf16.gmra.mxu0 %v519
  %v600 = vpop.f32.mrf.mxu0
  %v601 = vadd.f32 %v491, %v600
  %v602 = vpop.f32.mrf.mxu0
  %v603 = vpop.f32.mrf.mxu0
  %v604 = vadd.f32 %v491, %v603
  %v605 = vpop.f32.mrf.mxu0
  %606 = vmatprep.mubr.bf16.mxu0 0
  %607 = vmatmul.mubr.bf16.gmra.mxu0 %v522
  %v608 = vpop.f32.mrf.mxu0
  %v609 = vadd.f32 %v491, %v608
  %v610 = vpop.f32.mrf.mxu0
  %v611 = vpop.f32.mrf.mxu0
  %v612 = vadd.f32 %v491, %v611
  %v613 = vpop.f32.mrf.mxu0
  %614 = vmatprep.mubr.bf16.mxu0 0
  %615 = vmatmul.mubr.bf16.gmra.mxu0 %v525
  %v616 = vpop.f32.mrf.mxu0
  %v617 = vadd.f32 %v491, %v616
  %v618 = vpop.f32.mrf.mxu0
  %v619 = vpop.f32.mrf.mxu0
  %v620 = vadd.f32 %v491, %v619
  %v621 = vpop.f32.mrf.mxu0
  %622 = vmatprep.mubr.bf16.mxu0 0
  %623 = vmatmul.mubr.bf16.gmra.mxu0 %v528
  %v624 = vpop.f32.mrf.mxu0
  %v625 = vadd.f32 %v491, %v624
  %v626 = vpop.f32.mrf.mxu0
  %v627 = vpop.f32.mrf.mxu0
  %v628 = vadd.f32 %v491, %v627
  %v629 = vpop.f32.mrf.mxu0
  %630 = vmatprep.mubr.bf16.mxu0 0
  %631 = vmatmul.mubr.bf16.gmra.mxu0 %v531
  %v632 = vpop.f32.mrf.mxu0
  %v633 = vadd.f32 %v491, %v632
  %v634 = vpop.f32.mrf.mxu0
  %v635 = vpop.f32.mrf.mxu0
  %v636 = vadd.f32 %v491, %v635
  %v637 = vpop.f32.mrf.mxu0
  %638 = vmatprep.mubr.bf16.mxu0 0
  %639 = vmatmul.mubr.bf16.gmra.mxu0 %v534
  %v640 = vpop.f32.mrf.mxu0
  %v641 = vadd.f32 %v491, %v640
  %v642 = vpop.f32.mrf.mxu0
  %v643 = vpop.f32.mrf.mxu0
  %v644 = vadd.f32 %v491, %v643
  %v645 = vpop.f32.mrf.mxu0
  %646 = vmatprep.mubr.bf16.mxu0 0
  %647 = vmatmul.mubr.bf16.gmra.mxu0 %v537
  %v648 = vpop.f32.mrf.mxu0
  %v649 = vadd.f32 %v491, %v648
  %v650 = vpop.f32.mrf.mxu0
  %v651 = vpop.f32.mrf.mxu0
  %v652 = vadd.f32 %v491, %v651
  %v653 = vpop.f32.mrf.mxu0
  %654 = vmatprep.mubr.bf16.mxu0 0
  %655 = vmatmul.mubr.bf16.gmra.mxu0 %v540
  %v656 = vpop.f32.mrf.mxu0
  %v657 = vadd.f32 %v491, %v656
  %v658 = vpop.f32.mrf.mxu0
  %v659 = vpop.f32.mrf.mxu0
  %v660 = vadd.f32 %v491, %v659
  %v661 = vpop.f32.mrf.mxu0
  %662 = vmatprep.mubr.bf16.mxu0 0
  %663 = vmatmul.mubr.bf16.gmra.mxu0 %v543
  %v664 = vpop.f32.mrf.mxu0
  %v665 = vadd.f32 %v491, %v664
  %v666 = vpop.f32.mrf.mxu0
  %v667 = vpop.f32.mrf.mxu0
  %v668 = vadd.f32 %v491, %v667
  %v669 = vpop.f32.mrf.mxu0
  %670 = vmatprep.mubr.bf16.mxu0 0
  %671 = vmatmul.mubr.bf16.gmra.mxu0 %v546
  %v672 = vpop.f32.mrf.mxu0
  %v673 = vadd.f32 %v491, %v672
  %v674 = vpop.f32.mrf.mxu0
  %v675 = vpop.f32.mrf.mxu0
  %v676 = vadd.f32 %v491, %v675
  %v677 = vpop.f32.mrf.mxu0
  %678 = vmatprep.mubr.bf16.mxu0 0
  %679 = vmatmul.mubr.bf16.gmra.mxu0 %v549
  %v680 = vpop.f32.mrf.mxu0
  %v681 = vadd.f32 %v491, %v680
  %v682 = vpop.f32.mrf.mxu0
  %v683 = vpop.f32.mrf.mxu0
  %v684 = vadd.f32 %v491, %v683
  %v685 = vpop.f32.mrf.mxu0
  %686 = vmatprep.mubr.bf16.mxu0 0
  %687 = vmatmul.mubr.bf16.gmra.mxu0 %v552
  %v688 = vpop.f32.mrf.mxu0
  %v689 = vadd.f32 %v491, %v688
  %v690 = vpop.f32.mrf.mxu0
  %v691 = vpop.f32.mrf.mxu0
  %v692 = vadd.f32 %v491, %v691
  %v693 = vpop.f32.mrf.mxu0
  %694 = vmatprep.mubr.bf16.mxu0 0
  %695 = vmatmul.mubr.bf16.gmra.mxu0 %v555
  %v696 = vpop.f32.mrf.mxu0
  %v697 = vadd.f32 %v491, %v696
  %v698 = vpop.f32.mrf.mxu0
  %v699 = vpop.f32.mrf.mxu0
  %v700 = vadd.f32 %v491, %v699
  %v701 = vpop.f32.mrf.mxu0
  %702 = vmatprep.mubr.bf16.mxu0 0
  %703 = vmatmul.mubr.bf16.gmra.mxu0 %v558
  %v704 = vpop.f32.mrf.mxu0
  %v705 = vadd.f32 %v491, %v704
  %v706 = vpop.f32.mrf.mxu0
  %v707 = vpop.f32.mrf.mxu0
  %v708 = vadd.f32 %v491, %v707
  %v709 = vpop.f32.mrf.mxu0
  %710 = vmatprep.mubr.bf16.mxu0 0
  %711 = vmatmul.mubr.bf16.gmra.mxu0 %v561
  %v712 = vpop.f32.mrf.mxu0
  %v713 = vadd.f32 %v491, %v712
  %v714 = vpop.f32.mrf.mxu0
  %v715 = vpop.f32.mrf.mxu0
  %v716 = vadd.f32 %v491, %v715
  %v717 = vpop.f32.mrf.mxu0
  %718 = vmatprep.mubr.bf16.mxu0 0
  %719 = vmatmul.mubr.bf16.gmra.mxu0 %v564
  %v720 = vpop.f32.mrf.mxu0
  %v721 = vadd.f32 %v491, %v720
  %v722 = vpop.f32.mrf.mxu0
  %v723 = vpop.f32.mrf.mxu0
  %v724 = vadd.f32 %v491, %v723
  %v725 = vpop.f32.mrf.mxu0
  %726 = vdwg.mxu0
  %727 = vst.msk [vmem:[%s5] sm:$0xff] %vm92, %v601
  %728 = vst.msk [vmem:[%s5 + $0x8] sm:$0xff] %vm92, %v604
  %729 = vst.msk [vmem:[%s5 + $0x10] sm:$0xff] %vm92, %v609
  %730 = vst.msk [vmem:[%s5 + $0x18] sm:$0xff] %vm92, %v612
  %731 = vst.msk [vmem:[%s5 + $0x20] sm:$0xff] %vm92, %v617
  %732 = vst.msk [vmem:[%s5 + $0x28] sm:$0xff] %vm92, %v620
  %733 = vst.msk [vmem:[%s5 + $0x30] sm:$0xff] %vm92, %v625
  %734 = vst.msk [vmem:[%s5 + $0x38] sm:$0xff] %vm92, %v628
  %735 = vst.msk [vmem:[%s5 + $0x40] sm:$0xff] %vm92, %v633
  %736 = vst.msk [vmem:[%s5 + $0x48] sm:$0xff] %vm92, %v636
  %737 = vst.msk [vmem:[%s5 + $0x50] sm:$0xff] %vm92, %v641
  %738 = vst.msk [vmem:[%s5 + $0x58] sm:$0xff] %vm92, %v644
  %739 = vst.msk [vmem:[%s5 + $0x60] sm:$0xff] %vm92, %v649
  %740 = vst.msk [vmem:[%s5 + $0x68] sm:$0xff] %vm92, %v652
  %741 = vst.msk [vmem:[%s5 + $0x70] sm:$0xff] %vm92, %v657
  %742 = vst.msk [vmem:[%s5 + $0x78] sm:$0xff] %vm92, %v660
  %743 = vst.msk [vmem:[%s5 + $0x80] sm:$0xff] %vm92, %v665
  %744 = vst.msk [vmem:[%s5 + $0x88] sm:$0xff] %vm92, %v668
  %745 = vst.msk [vmem:[%s5 + $0x90] sm:$0xff] %vm92, %v673
  %746 = vst.msk [vmem:[%s5 + $0x98] sm:$0xff] %vm92, %v676
  %747 = vst.msk [vmem:[%s5 + $0xa0] sm:$0xff] %vm92, %v681
  %748 = vst.msk [vmem:[%s5 + $0xa8] sm:$0xff] %vm92, %v684
  %749 = vst.msk [vmem:[%s5 + $0xb0] sm:$0xff] %vm92, %v689
  %750 = vst.msk [vmem:[%s5 + $0xb8] sm:$0xff] %vm92, %v692
  %751 = vst.msk [vmem:[%s5 + $0xc0] sm:$0xff] %vm92, %v697
  %752 = vst.msk [vmem:[%s5 + $0xc8] sm:$0xff] %vm92, %v700
  %753 = vst.msk [vmem:[%s5 + $0xd0] sm:$0xff] %vm92, %v705
  %754 = vst.msk [vmem:[%s5 + $0xd8] sm:$0xff] %vm92, %v708
  %755 = vst.msk [vmem:[%s5 + $0xe0] sm:$0xff] %vm92, %v713
  %756 = vst.msk [vmem:[%s5 + $0xe8] sm:$0xff] %vm92, %v716
  %757 = vst.msk [vmem:[%s5 + $0xf0] sm:$0xff] %vm92, %v721
  %758 = vst.msk [vmem:[%s5 + $0xf8] sm:$0xff] %vm92, %v724
  // Predicated region
  $region22: #{tpu_custom_call.1} parent=0 // pred_check
    _
  $region23: #{tpu_custom_call.1} parent=0 // pred_check_branch
    %760 = sbr.rel (0) target = $region25
  $region24: #{tpu_custom_call.1} parent=0 // pred_region
    _
  $region25: #{tpu_custom_call.1} parent=0 // pred_fallthru
    _
  // Predicated region
  $region26: #{tpu_custom_call.1} parent=0 // pred_check
    _
  $region27: #{tpu_custom_call.1} parent=0 // pred_check_branch
    %762 = sbr.rel (0) target = $region29
  $region28: #{tpu_custom_call.1} parent=0 // pred_region
    _
  $region29: #{tpu_custom_call.1} parent=0 // pred_fallthru
    _

</llo_original>
